<compile_context>
chip_gen: v6e
topology: v6e:2x2x1
jax: 0.10.0
libtpu: 0.0.40
codegen_flags: <defaults>
</compile_context>

<pallas_src>
import jax
import jax.numpy as jnp
from jax.experimental import pallas as pl
from jax.experimental.pallas import tpu as pltpu


def _round_up(a, b):
    return ((a + b - 1) // b) * b


def sc_mixed_op_kernel(w_ref, x_ref, o_ref):
    # w_ref: SMEM (2,) -- architecture weights over ['none', 'skip']
    # x_ref: (block_rows, cols) VMEM tile of the lane-dense feature slab
    # o_ref: (block_rows, cols) output tile
    x = x_ref[...]
    w_none = w_ref[0]          # 'none' primitive: Zero()(x) = x * 0
    w_skip = w_ref[1]          # 'skip' primitive: Identity()(x) = x
    # ScMixedOp.forward: sum_i w_i * op_i(x). The 'none' term is kept so the
    # +-inf edge case matches PyTorch (produces NaN); it costs nothing here.
    mixed = w_none * (x * 0.0) + w_skip * x
    o_ref[...] = mixed.astype(o_ref.dtype)


def sc_mixed_op(x, weights, *, target_tile_bytes=4 << 20):
    """x: [N, H] node features. weights: [2] mixture weights over SC_PRIMITIVES.
    Returns weights[0] * (x * 0) + weights[1] * x, shape [N, H]."""
    N, H = x.shape
    total = N * H
    itemsize = jnp.dtype(x.dtype).itemsize

    # ---- lane-dense slab -------------------------------------------------
    # Row-major reshape of a contiguous array is a bitcast (no HBM copy).
    # Prefer the widest last dim that divides N*H for long unmasked vst runs;
    # otherwise pad the flat array to a multiple of 128 (at most 127 extra
    # elements) and slice the tail off after the kernel.
    flat = x.reshape(-1)
    cols = None
    for w in (1024, 512, 256, 128):
        if total % w == 0:
            cols = w
            break
    if cols is None:
        pad = (-total) % 128
        flat = jnp.pad(flat, (0, pad))
        cols = 128
        padded_total = total + pad
    else:
        padded_total = total
    rows = padded_total // cols
    x2 = flat.reshape(rows, cols)

    # ---- tiling ------------------------------------------------------------
    row_align = 16  # multiple of both the f32 (8) and bf16 (16) sublane tiles
    max_rows_by_bytes = max(
        row_align,
        (target_tile_bytes // (cols * itemsize)) // row_align * row_align,
    )
    if rows <= 2 * row_align:
        # Tiny input (e.g. the demo): one grid step covering the full array;
        # block_shape == full array dims so the (8,128) constraint holds even
        # when rows is not a multiple of 8.
        block_rows = rows
    else:
        # At least 2 grid steps so both v7x TensorCores stream, capped so each
        # tile stays ~target_tile_bytes (double-buffered in+out fits VMEM).
        half = _round_up(pl.cdiv(rows, 2), row_align)
        block_rows = min(max_rows_by_bytes, half)
    grid = (pl.cdiv(rows, block_rows),)

    w = weights.astype(jnp.float32)

    out2 = pl.pallas_call(
        sc_mixed_op_kernel,
        out_shape=jax.ShapeDtypeStruct((rows, cols), x.dtype),
        grid_spec=pl.GridSpec(
            grid=grid,
            in_specs=[
                # Two scalar mixture weights live in SMEM; no VMEM
                # double-buffering wasted on a constant block.
                pl.BlockSpec(memory_space=pltpu.MemorySpace.SMEM),
                pl.BlockSpec((block_rows, cols), lambda i: (i, 0)),
            ],
            out_specs=pl.BlockSpec((block_rows, cols), lambda i: (i, 0)),
        ),
        compiler_params=pltpu.CompilerParams(
            dimension_semantics=("parallel",),
            # 4 double-buffered ~4 MiB tiles = ~16 MiB, which is exactly v5e's
            # default scoped-VMEM budget; raise the limit (physical VMEM is
            # 128 MiB on v5e/v6e, 64 MiB per TC on v7x).
            vmem_limit_bytes=64 << 20,
        ),
        cost_estimate=pl.CostEstimate(
            flops=3 * padded_total,
            transcendentals=0,
            bytes_accessed=2 * padded_total * itemsize,
        ),
    )(w, x2)

    out_flat = out2.reshape(-1)
    if padded_total != total:
        out_flat = out_flat[:total]
    return out_flat.reshape(N, H)


def sc_mixed_op_ref(x, weights):
    return weights[0] * (x * 0.0) + weights[1] * x


if __name__ == "__main__":
    num_nodes = 64   # N
    hidden = 32      # H

    key = jax.random.PRNGKey(0)
    k_x, k_w = jax.random.split(key, 2)

    # Node features and the (softmaxed) architecture weights over the two
    # skip-connection primitives, as SANE produces them.
    x = jax.random.normal(k_x, (num_nodes, hidden), dtype=jnp.float32)
    weights = jax.nn.softmax(jax.random.normal(k_w, (2,), dtype=jnp.float32))

    out = sc_mixed_op(x, weights)
    out = jax.block_until_ready(out)

    ref = sc_mixed_op_ref(x, weights)
    assert out.shape == (num_nodes, hidden)
    assert jnp.allclose(out, ref, atol=1e-6, rtol=1e-6)

    # Also exercise a non-128-divisible shape (padded lane-dense path).
    x_odd = jax.random.normal(k_x, (37, 13), dtype=jnp.float32)
    out_odd = jax.block_until_ready(sc_mixed_op(x_odd, weights))
    assert jnp.allclose(out_odd, sc_mixed_op_ref(x_odd, weights), atol=1e-6, rtol=1e-6)

    print("KERNEL_OK")
</pallas_src>

<mosaic_0001>
module attributes {stable_mosaic.version = 11 : i64} {
  func.func @sc_mixed_op_kernel(%arg0: i32, %arg1: memref<2xf32, #tpu.memory_space<smem>>, %arg2: memref<2x1024xf32, #tpu.memory_space<vmem>>, %arg3: memref<2x1024xf32, #tpu.memory_space<vmem>>) attributes {dimension_semantics = [#tpu.dimension_semantics<parallel>], iteration_bounds = array<i64: 1>, scalar_prefetch = 0 : i64, scratch_operands = 0 : i64, tpu.core_type = #tpu.core_type<tc>, window_params = [{transform_indices = @transform_0, window_bounds = array<i64: 2>}, {transform_indices = @transform_1, window_bounds = array<i64: 2, 1024>}, {transform_indices = @transform_2, window_bounds = array<i64: 2, 1024>}]} {
    %c0 = arith.constant 0 : index
    %c0_0 = arith.constant 0 : index
    %0 = vector.load %arg2[%c0, %c0_0] : memref<2x1024xf32, #tpu.memory_space<vmem>>, vector<2x1024xf32>
    %c0_1 = arith.constant 0 : index
    %1 = memref.load %arg1[%c0_1] : memref<2xf32, #tpu.memory_space<smem>>
    %c1 = arith.constant 1 : index
    %2 = memref.load %arg1[%c1] : memref<2xf32, #tpu.memory_space<smem>>
    %cst = arith.constant 0.000000e+00 : f32
    %3 = vector.broadcast %cst : f32 to vector<2x1024xf32>
    %4 = arith.mulf %0, %3 : vector<2x1024xf32>
    %5 = vector.broadcast %1 : f32 to vector<2x1024xf32>
    %6 = arith.mulf %5, %4 : vector<2x1024xf32>
    %7 = vector.broadcast %2 : f32 to vector<2x1024xf32>
    %8 = arith.mulf %7, %0 : vector<2x1024xf32>
    %9 = arith.addf %6, %8 : vector<2x1024xf32>
    %c0_2 = arith.constant 0 : index
    %c0_3 = arith.constant 0 : index
    %10 = vector.load %arg3[%c0_2, %c0_3] : memref<2x1024xf32, #tpu.memory_space<vmem>>, vector<2x1024xf32>
    tpu.vector_store %arg3[%c0_2, %c0_3], %9 {strides = array<i32>} : memref<2x1024xf32, #tpu.memory_space<vmem>>, vector<2x1024xf32>,
    return
  }
  func.func @transform_0(%arg0: i32) -> i32 {
    %c0_i32 = arith.constant 0 : i32
    %c0_i32_0 = arith.constant 0 : i32
    return %c0_i32 : i32
  }
  func.func @transform_1(%arg0: i32) -> (i32, i32) {
    %c0_i32 = arith.constant 0 : i32
    %c0_i32_0 = arith.constant 0 : i32
    return %arg0, %c0_i32 : i32, i32
  }
  func.func @transform_2(%arg0: i32) -> (i32, i32) {
    %c0_i32 = arith.constant 0 : i32
    %c0_i32_0 = arith.constant 0 : i32
    return %arg0, %c0_i32 : i32, i32
  }
}

</mosaic_0001>

<llo_original>
// kernel: tpu_custom_call.1
$region0: #{tpu_custom_call.1}
  #allocation0 [shape = 'u32[]', space=smem, size = 0x4, offset = 0x4, fixed_abs, tag = 'smem constant byte address 0x4 - core index']
  #allocation1 [shape = 'u32[144,128]{1,0:T(1,128)}', space=vmem, size = 0x12000, scoped, tag = 'internal scratch']
  %s0 = inlined_call_operand.hbm [shape: f32[2], index: 0, kind: input, shape index: {}]
  %s1 = inlined_call_operand.hbm [shape: f32[2,1024], index: 1, kind: input, shape index: {}]
  %s2 = inlined_call_operand.hbm [shape: f32[2,1024], index: 2, kind: output, shape index: {}]
  %s3 = sld [smem:[#allocation0]]
  $region26: #{tpu_custom_call.1} parent=0
    _
  %s5 = ssub.s32 1, %s3
  %s6 = scalar_select 0, %s5, %s3
  $region1: #{tpu_custom_call.1} parent=0
    #allocation2 [shape = 'u8[512]{0}', space=smem, size = 0x200, scoped, tag = 'input window, operand 0, single buffered']
    #allocation3 [shape = 's32[1]{0}', space=sflag, size = 0x4, scoped, tag = 'scoped memory for tpu_custom_call.1']
    #allocation4 [shape = 's32[1]{0}', space=sflag, size = 0x4, scoped, tag = 'scoped memory for tpu_custom_call.1']
    #allocation5 [shape = 's32[1]{0}', space=sflag, size = 0x4, scoped, tag = 'scoped memory for tpu_custom_call.1']
    #allocation6 [shape = 'u8[8192]{0}', space=vmem, size = 0x2000, scoped, tag = 'input window, operand 1, single buffered']
    #allocation7 [shape = 'u8[8192]{0}', space=vmem, size = 0x2000, scoped, tag = 'output window, operand 0, single buffered']
    %7 = vsyncpa [#allocation5], 0
    %8 = vsyncpa [#allocation3], 0
    %9 = vsyncpa [#allocation4], 0
    // Predicated region
    $region2: #{tpu_custom_call.1} parent=1 // pred_check
      _
    $region3: #{tpu_custom_call.1} parent=1 // pred_check_branch
      %11 = sbr.rel (0) target = $region5
    $region4: #{tpu_custom_call.1} parent=1 // pred_region
      %s13 = ssub.s32 16, 16
      %14 = vsyncadd [#allocation5], %s13
      %17 = dma.hbm_to_smem %s0, 16, [#allocation2], [#allocation5]
    $region5: #{tpu_custom_call.1} parent=1 // pred_fallthru
      _
    // Predicated region
    $region6: #{tpu_custom_call.1} parent=1 // pred_check
      _
    $region7: #{tpu_custom_call.1} parent=1 // pred_check_branch
      %19 = sbr.rel (0) target = $region9
    $region8: #{tpu_custom_call.1} parent=1 // pred_region
      %s21 = ssub.s32 256, 256
      %22 = vsyncadd [#allocation3], %s21
      %s24 = sshll.u32 [#allocation6], 4
      %s25 = int_to_ptr.vmem [resolvable:$true] %s24
      %27 = dma.hbm_to_vmem [thread:$0]  %s1, 256, %s25, [#allocation3]
    $region9: #{tpu_custom_call.1} parent=1 // pred_fallthru
      _
    // Predicated region
    $region10: #{tpu_custom_call.1} parent=1 // pred_check
      _
    $region11: #{tpu_custom_call.1} parent=1 // pred_check_branch
      %29 = sbr.rel (0) target = $region13
    $region12: #{tpu_custom_call.1} parent=1 // pred_region
      %30 = dma.done [#allocation5], 16
    $region13: #{tpu_custom_call.1} parent=1 // pred_fallthru
      _
    // Predicated region
    $region14: #{tpu_custom_call.1} parent=1 // pred_check
      _
    $region15: #{tpu_custom_call.1} parent=1 // pred_check_branch
      %32 = sbr.rel (0) target = $region17
    $region16: #{tpu_custom_call.1} parent=1 // pred_region
      %33 = dma.done [#allocation3], 256
    $region17: #{tpu_custom_call.1} parent=1 // pred_fallthru
      _
    %34 = sfence
    %v35 = vld [vmem:[#allocation6] sm:$0xff]
    %v36 = vld [vmem:[#allocation6 + $0x8] sm:$0xff]
    %s37 = sld [smem:[#allocation2]]
    %s38 = sld [smem:[#allocation2 + $0x1]]
    %v39 = vmul.f32 %v35, 0.0
    %v40 = vmul.f32 %v36, 0.0
    %v41 = vstv %s37
    %v42 = vmul.f32 %v41, %v39
    %v43 = vmul.f32 %v41, %v40
    %v44 = vstv %s38
    %v45 = vmul.f32 %v44, %v35
    %v46 = vmul.f32 %v44, %v36
    %v47 = vadd.f32 %v42, %v45
    %v48 = vadd.f32 %v43, %v46
    %49 = vst [vmem:[#allocation7] sm:$0xff] %v47
    %50 = vst [vmem:[#allocation7 + $0x8] sm:$0xff] %v48
    // Predicated region
    $region18: #{tpu_custom_call.1} parent=1 // pred_check
      _
    $region19: #{tpu_custom_call.1} parent=1 // pred_check_branch
      %52 = sbr.rel (0) target = $region21
    $region20: #{tpu_custom_call.1} parent=1 // pred_region
      %s54 = ssub.s32 256, 256
      %55 = vsyncadd [#allocation4], %s54
      %s57 = sshll.u32 [#allocation7], 4
      %s58 = int_to_ptr.vmem [resolvable:$true] %s57
      %60 = dma.vmem_to_hbm [thread:$0]  %s58, 256, %s2, [#allocation4]
    $region21: #{tpu_custom_call.1} parent=1 // pred_fallthru
      _
    // Predicated region
    $region22: #{tpu_custom_call.1} parent=1 // pred_check
      _
    $region23: #{tpu_custom_call.1} parent=1 // pred_check_branch
      %62 = sbr.rel (0) target = $region25
    $region24: #{tpu_custom_call.1} parent=1 // pred_region
      %63 = dma.done [#allocation4], 256
    $region25: #{tpu_custom_call.1} parent=1 // pred_fallthru
      _
    %64 = vsyncpa [#allocation3], 1
    %65 = vsyncpa [#allocation4], 1
    %66 = vsyncpa [#allocation5], 1

</llo_original>
